<compile_context>
chip_gen: v5e
topology: v5e:2x2
jax: 0.10.0
libtpu: 0.0.40
codegen_flags: <defaults>
</compile_context>

<pallas_src>
import functools

import jax
import jax.numpy as jnp
import numpy as np
from jax.experimental import pallas as pl
from jax.experimental.pallas import tpu as pltpu


def _round_up(n, m):
    return ((n + m - 1) // m) * m


def _mha_kernel(x_ref, wq_ref, bq_ref, wk_ref, bk_ref, wv_ref, bv_ref,
                wo_ref, bo_ref, pos_ref, o_ref, acc_ref,
                *, n_head, n_token, batch_block, dk_pad):
    """One grid step = `batch_block` batch elements (M = batch_block * n_token rows)."""
    x = x_ref[0]                                       # (M, D) bf16
    m_rows = batch_block * n_token

    acc_ref[...] = jnp.zeros_like(acc_ref)             # (M, D) f32 output accumulator

    @pl.loop(0, n_head)
    def _(h):
        # Per-head projections straight into head-major, 128-lane-padded tiles:
        # (M, D) @ (D, dk_pad), f32 MXU accumulation.  Bias-add fused with the
        # bf16 cast so no f32 (M, D) copies stay alive.  The 1/sqrt(d_k) scale
        # is folded into wq / bq offline.
        qh = (jnp.dot(x, wq_ref[h], preferred_element_type=jnp.float32)
              + bq_ref[h]).astype(jnp.bfloat16)        # (M, dk_pad)
        kh = (jnp.dot(x, wk_ref[h], preferred_element_type=jnp.float32)
              + bk_ref[h]).astype(jnp.bfloat16)
        vh = (jnp.dot(x, wv_ref[h], preferred_element_type=jnp.float32)
              + bv_ref[h]).astype(jnp.bfloat16)

        # Pure leading-dim split (lanes untouched) -> batched attention dots.
        q3 = qh.reshape(batch_block, n_token, dk_pad)
        k3 = kh.reshape(batch_block, n_token, dk_pad)
        v3 = vh.reshape(batch_block, n_token, dk_pad)

        # Relative-position bias for this head, cast to f32 once (hoisted out
        # of the batch dimension).
        pos_h = pos_ref[h].astype(jnp.float32)         # (T, T)

        # scores = (q*scale) @ k^T + pos ; batched MXU contraction over the
        # last dims (no XLU transpose).  Zero-padded lanes contribute nothing.
        s = jnp.einsum("btd,bsd->bts", q3, k3,
                       preferred_element_type=jnp.float32)       # (bb, T, T)
        s = s + pos_h

        # Numerically stable softmax; the denominator is applied after
        # probs @ v (scales a (bb, T, dk_pad) tile; reciprocal on the EUP).
        # f32 exp kept for v5e compatibility (bf16 exp is a v6e/v7x micro-opt).
        m = jnp.max(s, axis=-1, keepdims=True)
        p = jnp.exp(s - m)
        denom = jnp.sum(p, axis=-1, keepdims=True)               # (bb, T, 1)
        ho = jnp.einsum("bts,bsd->btd", p.astype(jnp.bfloat16), v3,
                        preferred_element_type=jnp.float32)      # (bb, T, dk_pad)
        ho = ho * pl.reciprocal(denom, approx=True)
        ho2 = ho.reshape(m_rows, dk_pad).astype(jnp.bfloat16)

        # Fold this head's output-projection contribution straight into the
        # (M, D) accumulator: full-width lane-dense store, no per-head
        # d_k-wide masked stores, no attention scratch.
        acc_ref[...] += jnp.dot(ho2, wo_ref[h],
                                preferred_element_type=jnp.float32)

    o_ref[0] = (acc_ref[...] + bo_ref[...]).astype(o_ref.dtype)


def prepare_params(params, pos_emb, *, n_head):
    """Offline prep: fold 1/sqrt(d_k) into Wq/bq, split weights per head,
    zero-pad d_k up to a multiple of 128 lanes, cast matmul operands to bf16."""
    d_embed = params["wq"].shape[0]
    d_k = d_embed // n_head
    dk_pad = _round_up(d_k, 128)
    scale = 1.0 / np.sqrt(d_k)

    def qkv_weight(w, s=1.0):
        # (D, D) -> (H, D, dk_pad): per-head column slices, zero-padded lanes.
        w = np.asarray(w, np.float32) * s
        w = w.reshape(d_embed, n_head, d_k).transpose(1, 0, 2)    # (H, D, d_k)
        out = np.zeros((n_head, d_embed, dk_pad), np.float32)
        out[:, :, :d_k] = w
        return jnp.asarray(out, jnp.bfloat16)

    def qkv_bias(b, s=1.0):
        # (1, D) -> (H, 1, dk_pad), f32.
        b = np.asarray(b, np.float32).reshape(n_head, d_k) * s
        out = np.zeros((n_head, 1, dk_pad), np.float32)
        out[:, 0, :d_k] = b
        return jnp.asarray(out, jnp.float32)

    def out_weight(w):
        # (D, D) -> (H, dk_pad, D): per-head row slices, zero-padded rows, so
        # the head-major attention output feeds the projection with no relayout.
        w = np.asarray(w, np.float32).reshape(n_head, d_k, d_embed)
        out = np.zeros((n_head, dk_pad, d_embed), np.float32)
        out[:, :d_k, :] = w
        return jnp.asarray(out, jnp.bfloat16)

    prep = {
        "wq": qkv_weight(params["wq"], scale), "bq": qkv_bias(params["bq"], scale),
        "wk": qkv_weight(params["wk"]),        "bk": qkv_bias(params["bk"]),
        "wv": qkv_weight(params["wv"]),        "bv": qkv_bias(params["bv"]),
        "wo": out_weight(params["wo"]),
        "bo": jnp.asarray(np.asarray(params["bo"], np.float32)),  # (1, D) f32
        "dk_pad": dk_pad,
    }
    return prep, pos_emb.astype(jnp.bfloat16)


def _pick_batch_block(n_batch, n_token, target_rows=256, min_steps=2):
    """Pack batch elements per grid step: as many rows as possible up to
    `target_rows` (feeds the v6e/v7x 256-wide MXU), but keep at least
    `min_steps` grid steps (2 TensorCores on v7x) whenever the batch allows."""
    best = 1
    for cand in range(1, n_batch + 1):
        if n_batch % cand:
            continue
        if cand * n_token > max(target_rows, n_token):
            continue
        if (n_batch // cand) < min_steps and n_batch >= min_steps:
            continue
        best = max(best, cand)
    return best


def _vmem_limit_bytes(M, D, H, T, dk_pad, batch_block):
    """Footprint-derived VMEM limit, capped below the physical VMEM of the
    current generation (64 MiB on v7x, 128 MiB on v5e/v6e)."""
    bf16, f32 = 2, 4
    est = (2 * M * D * bf16                 # x tile, double-buffered
           + 2 * M * D * bf16               # output tile, double-buffered
           + 4 * H * D * dk_pad * bf16      # Wq/Wk/Wv/Wo (single-buffered)
           + 3 * H * dk_pad * f32 + D * f32 # biases
           + H * T * T * bf16               # positional bias
           + M * D * f32                    # output accumulator scratch
           + 3 * M * dk_pad * bf16          # qh/kh/vh per-head temporaries
           + 3 * batch_block * T * T * f32) # scores / probs temporaries
    limit = 2 * est + (8 << 20)             # headroom for compiler temporaries
    try:
        cap = int(pltpu.get_tpu_info().vmem_capacity_bytes)
    except Exception:
        cap = 64 << 20                      # conservative (v7x) if query fails
    return int(max(16 << 20, min(limit, cap - (4 << 20), 128 << 20)))


@functools.lru_cache(maxsize=None)
def _single_buffer_supported():
    """One-time feature probe for pipeline_mode=pl.Buffered(1), decided before
    any jit of the caller (a try/except around the real call would not fire
    once the caller is jitted)."""
    def probe_kernel(x_ref, o_ref):
        o_ref[...] = x_ref[...] + 1.0
    try:
        fn = pl.pallas_call(
            probe_kernel,
            out_shape=jax.ShapeDtypeStruct((8, 128), jnp.float32),
            grid=(1,),
            in_specs=[pl.BlockSpec((8, 128), lambda i: (0, 0),
                                   pipeline_mode=pl.Buffered(1))],
            out_specs=pl.BlockSpec((8, 128), lambda i: (0, 0)),
        )
        jax.block_until_ready(fn(jnp.zeros((8, 128), jnp.float32)))
        return True
    except Exception:
        return False


def multi_head_attention(x, prep, pos_emb, *, n_head, batch_block=None,
                         out_dtype=jnp.bfloat16):
    """x: (B, T, D).  prep/pos_emb: output of prepare_params.
    Returns (B, T, D) in `out_dtype` (bf16 by default: halves HBM writeback)."""
    B, T, D = x.shape
    H = n_head
    assert D % H == 0
    dk_pad = prep["dk_pad"]
    assert pos_emb.shape == (H, T, T)

    if batch_block is None:
        batch_block = _pick_batch_block(B, T)
    assert B % batch_block == 0
    n_steps = B // batch_block
    M = batch_block * T

    x2 = x.astype(jnp.bfloat16).reshape(n_steps, M, D)

    kernel = functools.partial(_mha_kernel, n_head=H, n_token=T,
                               batch_block=batch_block, dk_pad=dk_pad)

    single_buf = _single_buffer_supported()

    def inv(shape):
        # Grid-invariant operand: DMA'd once; single VMEM buffer if supported.
        idx = lambda g, _n=len(shape): (0,) * _n
        if single_buf:
            return pl.BlockSpec(shape, idx, pipeline_mode=pl.Buffered(1))
        return pl.BlockSpec(shape, idx)

    grid_spec = pltpu.PrefetchScalarGridSpec(
        num_scalar_prefetch=0,
        grid=(n_steps,),
        in_specs=[
            pl.BlockSpec((1, M, D), lambda g: (g, 0, 0)),   # x
            inv((H, D, dk_pad)), inv((H, 1, dk_pad)),       # Wq*scale, bq*scale
            inv((H, D, dk_pad)), inv((H, 1, dk_pad)),       # Wk, bk
            inv((H, D, dk_pad)), inv((H, 1, dk_pad)),       # Wv, bv
            inv((H, dk_pad, D)), inv((1, D)),               # Wo, bo
            inv((H, T, T)),                                 # relative pos bias
        ],
        out_specs=pl.BlockSpec((1, M, D), lambda g: (g, 0, 0)),
        scratch_shapes=[pltpu.VMEM((M, D), jnp.float32)],
    )

    # Advisory cost estimate so XLA schedules neighbouring ops realistically.
    proj_flops = 8 * B * T * D * H * dk_pad             # q/k/v/out projections
    attn_flops = 4 * B * H * T * T * dk_pad             # scores + probs@v
    bytes_accessed = (2 * B * T * D * 2                  # x in + out (bf16)
                      + 4 * H * D * dk_pad * 2           # weights (bf16)
                      + H * T * T * 2                    # pos bias (bf16)
                      + (3 * H * dk_pad + D) * 4)        # biases (f32)
    cost = pl.CostEstimate(flops=proj_flops + attn_flops,
                           transcendentals=B * H * T * T,
                           bytes_accessed=bytes_accessed)

    out = pl.pallas_call(
        kernel,
        out_shape=jax.ShapeDtypeStruct((n_steps, M, D), out_dtype),
        grid_spec=grid_spec,
        compiler_params=pltpu.CompilerParams(
            dimension_semantics=("parallel",),
            vmem_limit_bytes=_vmem_limit_bytes(M, D, H, T, dk_pad, batch_block)),
        cost_estimate=cost,
    )(x2, prep["wq"], prep["bq"], prep["wk"], prep["bk"],
      prep["wv"], prep["bv"], prep["wo"], prep["bo"], pos_emb)
    return out.reshape(B, T, D)


def reference_mha(x, params, pos_emb, *, n_head):
    """Pure-JAX f32 reference mirroring the PyTorch forward exactly."""
    B, T, D = x.shape
    d_k = D // n_head
    scale = 1.0 / np.sqrt(d_k)
    q = x @ params["wq"] + params["bq"][0]
    k = x @ params["wk"] + params["bk"][0]
    v = x @ params["wv"] + params["bv"][0]
    q = q.reshape(B, T, n_head, d_k).transpose(0, 2, 1, 3)        # (B,H,T,dk)
    k = k.reshape(B, T, n_head, d_k).transpose(0, 2, 3, 1)        # (B,H,dk,T)
    v = v.reshape(B, T, n_head, d_k).transpose(0, 2, 1, 3)        # (B,H,T,dk)
    scores = jnp.einsum("bhtd,bhds->bhts", q * scale, k) + pos_emb[None]
    probs = jax.nn.softmax(scores, axis=-1)
    attn = jnp.einsum("bhts,bhsd->bhtd", probs, v)
    attn = attn.transpose(0, 2, 1, 3).reshape(B, T, D)
    return attn @ params["wo"] + params["bo"][0]


def make_params(key, d_embed):
    keys = jax.random.split(key, 9)
    std = 1.0 / np.sqrt(d_embed)
    def w(k): return jax.random.uniform(k, (d_embed, d_embed), jnp.float32, -std, std)
    def b(k): return jax.random.uniform(k, (1, d_embed), jnp.float32, -std, std)
    return {
        "wq": w(keys[0]), "bq": b(keys[1]),
        "wk": w(keys[2]), "bk": b(keys[3]),
        "wv": w(keys[4]), "bv": b(keys[5]),
        "wo": w(keys[6]), "bo": b(keys[7]),
    }, keys[8]


def make_relative_position_bias(key, max_seq_len, n_head):
    # table: (2*L-1, H), trunc_normal(std=0.02) approximated by a clipped normal.
    table = 0.02 * jax.random.normal(key, (2 * max_seq_len - 1, n_head), jnp.float32)
    table = jnp.clip(table, -0.04, 0.04)
    coords_h = np.arange(max_seq_len)
    coords_w = np.arange(max_seq_len - 1, -1, -1)
    index = (coords_h[:, None] + coords_w[None, :]).flatten()     # (L*L,)
    pos = table[jnp.asarray(index)].reshape(max_seq_len, max_seq_len, n_head)
    return jnp.transpose(pos, (2, 0, 1))                          # (H, L, L)


if __name__ == "__main__":
    # Small shapes consistent with the module: the forward assumes
    # n_token == max_seq_len when relative_position_embedding=True.
    B, T, D, H = 2, 8, 32, 4

    key = jax.random.PRNGKey(0)
    params, key = make_params(key, D)
    key, kx, kpos = jax.random.split(key, 3)
    x = jax.random.normal(kx, (B, T, D), jnp.float32)
    pos_emb = make_relative_position_bias(kpos, max_seq_len=T, n_head=H)

    prep, pos_bf16 = prepare_params(params, pos_emb, n_head=H)

    out = multi_head_attention(x, prep, pos_bf16, n_head=H)
    out = jax.block_until_ready(out)

    ref = reference_mha(x, params, pos_emb, n_head=H)
    # bf16 matmul operands + bf16 output + approx reciprocal -> loosened
    # tolerance vs the f32 reference.
    np.testing.assert_allclose(np.asarray(out.astype(jnp.float32)),
                               np.asarray(ref), rtol=3e-2, atol=3e-2)
    print("KERNEL_OK")
</pallas_src>

<mosaic_0001>
module attributes {stable_mosaic.version = 11 : i64} {
  func.func @probe_kernel(%arg0: i32, %arg1: memref<8x128xf32, #tpu.memory_space<vmem>>, %arg2: memref<8x128xf32, #tpu.memory_space<vmem>>) attributes {dimension_semantics = [#tpu.dimension_semantics<arbitrary>], iteration_bounds = array<i64: 1>, scalar_prefetch = 0 : i64, scratch_operands = 0 : i64, tpu.core_type = #tpu.core_type<tc>, window_params = [{pipeline_mode = #tpu.pipeline_mode<synchronous>, transform_indices = @transform_0, window_bounds = array<i64: 8, 128>}, {pipeline_mode = #tpu.pipeline_mode<synchronous>, transform_indices = @transform_1, window_bounds = array<i64: 8, 128>}]} {
    %c0 = arith.constant 0 : index
    %c0_0 = arith.constant 0 : index
    %0 = vector.load %arg1[%c0, %c0_0] : memref<8x128xf32, #tpu.memory_space<vmem>>, vector<8x128xf32>
    %cst = arith.constant 1.000000e+00 : f32
    %1 = vector.broadcast %cst : f32 to vector<8x128xf32>
    %2 = arith.addf %0, %1 : vector<8x128xf32>
    %c0_1 = arith.constant 0 : index
    %c0_2 = arith.constant 0 : index
    %3 = vector.load %arg2[%c0_1, %c0_2] : memref<8x128xf32, #tpu.memory_space<vmem>>, vector<8x128xf32>
    tpu.vector_store %arg2[%c0_1, %c0_2], %2 {strides = array<i32>} : memref<8x128xf32, #tpu.memory_space<vmem>>, vector<8x128xf32>,
    return
  }
  func.func @transform_0(%arg0: i32) -> (i32, i32) {
    %c0_i32 = arith.constant 0 : i32
    %c0_i32_0 = arith.constant 0 : i32
    %c0_i32_1 = arith.constant 0 : i32
    return %c0_i32, %c0_i32_0 : i32, i32
  }
  func.func @transform_1(%arg0: i32) -> (i32, i32) {
    %c0_i32 = arith.constant 0 : i32
    %c0_i32_0 = arith.constant 0 : i32
    %c0_i32_1 = arith.constant 0 : i32
    return %c0_i32, %c0_i32_0 : i32, i32
  }
}

module attributes {stable_mosaic.version = 11 : i64} {
  func.func @_mha_kernel(%arg0: i32, %arg1: memref<1x8x32xbf16, #tpu.memory_space<vmem>>, %arg2: memref<4x32x128xbf16, #tpu.memory_space<vmem>>, %arg3: memref<4x1x128xf32, #tpu.memory_space<vmem>>, %arg4: memref<4x32x128xbf16, #tpu.memory_space<vmem>>, %arg5: memref<4x1x128xf32, #tpu.memory_space<vmem>>, %arg6: memref<4x32x128xbf16, #tpu.memory_space<vmem>>, %arg7: memref<4x1x128xf32, #tpu.memory_space<vmem>>, %arg8: memref<4x128x32xbf16, #tpu.memory_space<vmem>>, %arg9: memref<1x32xf32, #tpu.memory_space<vmem>>, %arg10: memref<4x8x8xbf16, #tpu.memory_space<vmem>>, %arg11: memref<1x8x32xbf16, #tpu.memory_space<vmem>>, %arg12: memref<8x32xf32, #tpu.memory_space<vmem>>) attributes {dimension_semantics = [#tpu.dimension_semantics<parallel>], iteration_bounds = array<i64: 2>, scalar_prefetch = 0 : i64, scratch_operands = 1 : i64, tpu.core_type = #tpu.core_type<tc>, window_params = [{transform_indices = @transform_0, window_bounds = array<i64: 1, 8, 32>}, {pipeline_mode = #tpu.pipeline_mode<synchronous>, transform_indices = @transform_1, window_bounds = array<i64: 4, 32, 128>}, {pipeline_mode = #tpu.pipeline_mode<synchronous>, transform_indices = @transform_2, window_bounds = array<i64: 4, 1, 128>}, {pipeline_mode = #tpu.pipeline_mode<synchronous>, transform_indices = @transform_3, window_bounds = array<i64: 4, 32, 128>}, {pipeline_mode = #tpu.pipeline_mode<synchronous>, transform_indices = @transform_4, window_bounds = array<i64: 4, 1, 128>}, {pipeline_mode = #tpu.pipeline_mode<synchronous>, transform_indices = @transform_5, window_bounds = array<i64: 4, 32, 128>}, {pipeline_mode = #tpu.pipeline_mode<synchronous>, transform_indices = @transform_6, window_bounds = array<i64: 4, 1, 128>}, {pipeline_mode = #tpu.pipeline_mode<synchronous>, transform_indices = @transform_7, window_bounds = array<i64: 4, 128, 32>}, {pipeline_mode = #tpu.pipeline_mode<synchronous>, transform_indices = @transform_8, window_bounds = array<i64: 1, 32>}, {pipeline_mode = #tpu.pipeline_mode<synchronous>, transform_indices = @transform_9, window_bounds = array<i64: 4, 8, 8>}, {transform_indices = @transform_10, window_bounds = array<i64: 1, 8, 32>}]} {
    %c0 = arith.constant 0 : index
    %c0_0 = arith.constant 0 : index
    %c0_1 = arith.constant 0 : index
    %0 = vector.load %arg1[%c0, %c0_0, %c0_1] : memref<1x8x32xbf16, #tpu.memory_space<vmem>>, vector<1x8x32xbf16>
    %1 = vector.shape_cast %0 : vector<1x8x32xbf16> to vector<8x32xbf16>
    %cst = arith.constant 0.000000e+00 : f32
    %2 = vector.broadcast %cst : f32 to vector<8x32xf32>
    %c0_2 = arith.constant 0 : index
    %c0_3 = arith.constant 0 : index
    %3 = vector.load %arg12[%c0_2, %c0_3] : memref<8x32xf32, #tpu.memory_space<vmem>>, vector<8x32xf32>
    tpu.vector_store %arg12[%c0_2, %c0_3], %2 {strides = array<i32>} : memref<8x32xf32, #tpu.memory_space<vmem>>, vector<8x32xf32>,
    %c0_i32 = arith.constant 0 : i32
    %c4_i32 = arith.constant 4 : i32
    %4 = arith.addi %c0_i32, %c4_i32 : i32
    %c1_i32 = arith.constant 1 : i32
    scf.for %arg13 = %c0_i32 to %4 step %c1_i32  : i32 {
      %c1_i32_12 = arith.constant 1 : i32
      %13 = arith.muli %arg13, %c1_i32_12 : i32
      %c0_i32_13 = arith.constant 0 : i32
      %14 = arith.addi %c0_i32_13, %13 : i32
      %15 = arith.index_cast %14 : i32 to index
      %c0_14 = arith.constant 0 : index
      %c0_15 = arith.constant 0 : index
      %16 = vector.load %arg2[%15, %c0_14, %c0_15] : memref<4x32x128xbf16, #tpu.memory_space<vmem>>, vector<1x32x128xbf16>
      %17 = vector.shape_cast %16 : vector<1x32x128xbf16> to vector<32x128xbf16>
      %cst_16 = arith.constant dense<0.000000e+00> : vector<8x128xf32>
      %18 = tpu.matmul %1, %17, %cst_16 {dimension_numbers = #tpu.dot_dimension_numbers<[1], [0], [0], [1], [0, 0, 1, 1], [], []>} : vector<8x32xbf16>, vector<32x128xbf16>, vector<8x128xf32> -> vector<8x128xf32>
      %19 = arith.index_cast %14 : i32 to index
      %c0_17 = arith.constant 0 : index
      %c0_18 = arith.constant 0 : index
      %20 = vector.load %arg3[%19, %c0_17, %c0_18] : memref<4x1x128xf32, #tpu.memory_space<vmem>>, vector<1x1x128xf32>
      %21 = vector.shape_cast %20 : vector<1x1x128xf32> to vector<1x128xf32>
      %22 = vector.broadcast %21 : vector<1x128xf32> to vector<8x128xf32>
      %23 = arith.addf %18, %22 : vector<8x128xf32>
      %24 = arith.truncf %23 : vector<8x128xf32> to vector<8x128xbf16>
      %25 = arith.index_cast %14 : i32 to index
      %c0_19 = arith.constant 0 : index
      %c0_20 = arith.constant 0 : index
      %26 = vector.load %arg4[%25, %c0_19, %c0_20] : memref<4x32x128xbf16, #tpu.memory_space<vmem>>, vector<1x32x128xbf16>
      %27 = vector.shape_cast %26 : vector<1x32x128xbf16> to vector<32x128xbf16>
      %cst_21 = arith.constant dense<0.000000e+00> : vector<8x128xf32>
      %28 = tpu.matmul %1, %27, %cst_21 {dimension_numbers = #tpu.dot_dimension_numbers<[1], [0], [0], [1], [0, 0, 1, 1], [], []>} : vector<8x32xbf16>, vector<32x128xbf16>, vector<8x128xf32> -> vector<8x128xf32>
      %29 = arith.index_cast %14 : i32 to index
      %c0_22 = arith.constant 0 : index
      %c0_23 = arith.constant 0 : index
      %30 = vector.load %arg5[%29, %c0_22, %c0_23] : memref<4x1x128xf32, #tpu.memory_space<vmem>>, vector<1x1x128xf32>
      %31 = vector.shape_cast %30 : vector<1x1x128xf32> to vector<1x128xf32>
      %32 = vector.broadcast %31 : vector<1x128xf32> to vector<8x128xf32>
      %33 = arith.addf %28, %32 : vector<8x128xf32>
      %34 = arith.truncf %33 : vector<8x128xf32> to vector<8x128xbf16>
      %35 = arith.index_cast %14 : i32 to index
      %c0_24 = arith.constant 0 : index
      %c0_25 = arith.constant 0 : index
      %36 = vector.load %arg6[%35, %c0_24, %c0_25] : memref<4x32x128xbf16, #tpu.memory_space<vmem>>, vector<1x32x128xbf16>
      %37 = vector.shape_cast %36 : vector<1x32x128xbf16> to vector<32x128xbf16>
      %cst_26 = arith.constant dense<0.000000e+00> : vector<8x128xf32>
      %38 = tpu.matmul %1, %37, %cst_26 {dimension_numbers = #tpu.dot_dimension_numbers<[1], [0], [0], [1], [0, 0, 1, 1], [], []>} : vector<8x32xbf16>, vector<32x128xbf16>, vector<8x128xf32> -> vector<8x128xf32>
      %39 = arith.index_cast %14 : i32 to index
      %c0_27 = arith.constant 0 : index
      %c0_28 = arith.constant 0 : index
      %40 = vector.load %arg7[%39, %c0_27, %c0_28] : memref<4x1x128xf32, #tpu.memory_space<vmem>>, vector<1x1x128xf32>
      %41 = vector.shape_cast %40 : vector<1x1x128xf32> to vector<1x128xf32>
      %42 = vector.broadcast %41 : vector<1x128xf32> to vector<8x128xf32>
      %43 = arith.addf %38, %42 : vector<8x128xf32>
      %44 = arith.truncf %43 : vector<8x128xf32> to vector<8x128xbf16>
      %45 = vector.shape_cast %24 : vector<8x128xbf16> to vector<1x8x128xbf16>
      %46 = vector.shape_cast %34 : vector<8x128xbf16> to vector<1x8x128xbf16>
      %47 = vector.shape_cast %44 : vector<8x128xbf16> to vector<1x8x128xbf16>
      %48 = arith.index_cast %14 : i32 to index
      %c0_29 = arith.constant 0 : index
      %c0_30 = arith.constant 0 : index
      %49 = vector.load %arg10[%48, %c0_29, %c0_30] : memref<4x8x8xbf16, #tpu.memory_space<vmem>>, vector<1x8x8xbf16>
      %50 = vector.shape_cast %49 : vector<1x8x8xbf16> to vector<8x8xbf16>
      %51 = arith.extf %50 : vector<8x8xbf16> to vector<8x8xf32>
      "tpu.trace_start"() <{level = 10 : i32, message = "btd,bsd->bts"}> : () -> ()
      %cst_31 = arith.constant dense<0.000000e+00> : vector<1x8x8xf32>
      %52 = tpu.matmul %45, %46, %cst_31 {dimension_numbers = #tpu.dot_dimension_numbers<[2], [2], [1], [1], [0, 0, 0, 1, 1, 1], [0], [0]>} : vector<1x8x128xbf16>, vector<1x8x128xbf16>, vector<1x8x8xf32> -> vector<1x8x8xf32>
      "tpu.trace_stop"() : () -> ()
      %53 = vector.shape_cast %51 : vector<8x8xf32> to vector<1x8x8xf32>
      %54 = arith.addf %52, %53 : vector<1x8x8xf32>
      %cst_32 = arith.constant dense<0xFF800000> : vector<1x8xf32>
      %55 = vector.multi_reduction <maximumf>, %54, %cst_32 [2] : vector<1x8x8xf32> to vector<1x8xf32>
      %56 = vector.shape_cast %55 : vector<1x8xf32> to vector<1x8x1xf32>
      %57 = vector.broadcast %56 : vector<1x8x1xf32> to vector<1x8x8xf32>
      %58 = arith.subf %54, %57 : vector<1x8x8xf32>
      %59 = math.exp %58 : vector<1x8x8xf32>
      %cst_33 = arith.constant dense<0.000000e+00> : vector<1x8xf32>
      %60 = vector.multi_reduction <add>, %59, %cst_33 [2] : vector<1x8x8xf32> to vector<1x8xf32>
      %61 = vector.shape_cast %60 : vector<1x8xf32> to vector<1x8x1xf32>
      %62 = arith.truncf %59 : vector<1x8x8xf32> to vector<1x8x8xbf16>
      "tpu.trace_start"() <{level = 10 : i32, message = "bts,bsd->btd"}> : () -> ()
      %cst_34 = arith.constant dense<0.000000e+00> : vector<1x8x128xf32>
      %63 = tpu.matmul %62, %47, %cst_34 {dimension_numbers = #tpu.dot_dimension_numbers<[2], [1], [1], [2], [0, 0, 0, 1, 1, 2], [0], [0]>} : vector<1x8x8xbf16>, vector<1x8x128xbf16>, vector<1x8x128xf32> -> vector<1x8x128xf32>
      "tpu.trace_stop"() : () -> ()
      %64 = tpu.reciprocal %61 {approx = true} : vector<1x8x1xf32> -> vector<1x8x1xf32>
      %65 = vector.broadcast %64 : vector<1x8x1xf32> to vector<1x8x128xf32>
      %66 = arith.mulf %63, %65 : vector<1x8x128xf32>
      %67 = vector.shape_cast %66 : vector<1x8x128xf32> to vector<8x128xf32>
      %68 = arith.truncf %67 : vector<8x128xf32> to vector<8x128xbf16>
      %c0_35 = arith.constant 0 : index
      %c0_36 = arith.constant 0 : index
      %69 = vector.load %arg12[%c0_35, %c0_36] : memref<8x32xf32, #tpu.memory_space<vmem>>, vector<8x32xf32>
      %70 = arith.index_cast %14 : i32 to index
      %c0_37 = arith.constant 0 : index
      %c0_38 = arith.constant 0 : index
      %71 = vector.load %arg8[%70, %c0_37, %c0_38] : memref<4x128x32xbf16, #tpu.memory_space<vmem>>, vector<1x128x32xbf16>
      %72 = vector.shape_cast %71 : vector<1x128x32xbf16> to vector<128x32xbf16>
      %cst_39 = arith.constant dense<0.000000e+00> : vector<8x32xf32>
      %73 = tpu.matmul %68, %72, %cst_39 {dimension_numbers = #tpu.dot_dimension_numbers<[1], [0], [0], [1], [0, 0, 1, 1], [], []>} : vector<8x128xbf16>, vector<128x32xbf16>, vector<8x32xf32> -> vector<8x32xf32>
      %74 = arith.addf %69, %73 : vector<8x32xf32>
      %c0_40 = arith.constant 0 : index
      %c0_41 = arith.constant 0 : index
      %75 = vector.load %arg12[%c0_40, %c0_41] : memref<8x32xf32, #tpu.memory_space<vmem>>, vector<8x32xf32>
      tpu.vector_store %arg12[%c0_40, %c0_41], %74 {strides = array<i32>} : memref<8x32xf32, #tpu.memory_space<vmem>>, vector<8x32xf32>,
    }
    %c4_i32_4 = arith.constant 4 : i32
    %c0_5 = arith.constant 0 : index
    %c0_6 = arith.constant 0 : index
    %5 = vector.load %arg12[%c0_5, %c0_6] : memref<8x32xf32, #tpu.memory_space<vmem>>, vector<8x32xf32>
    %c0_7 = arith.constant 0 : index
    %c0_8 = arith.constant 0 : index
    %6 = vector.load %arg9[%c0_7, %c0_8] : memref<1x32xf32, #tpu.memory_space<vmem>>, vector<1x32xf32>
    %7 = vector.broadcast %6 : vector<1x32xf32> to vector<8x32xf32>
    %8 = arith.addf %5, %7 : vector<8x32xf32>
    %9 = arith.truncf %8 : vector<8x32xf32> to vector<8x32xbf16>
    %c0_9 = arith.constant 0 : index
    %c0_10 = arith.constant 0 : index
    %c0_11 = arith.constant 0 : index
    %10 = vector.load %arg11[%c0_9, %c0_10, %c0_11] : memref<1x8x32xbf16, #tpu.memory_space<vmem>>, vector<1x8x32xbf16>
    %11 = vector.shape_cast %10 : vector<1x8x32xbf16> to vector<8x32xbf16>
    %12 = vector.shape_cast %9 : vector<8x32xbf16> to vector<1x8x32xbf16>
    tpu.vector_store %arg11[%c0_9, %c0_10, %c0_11], %12 {strides = array<i32>} : memref<1x8x32xbf16, #tpu.memory_space<vmem>>, vector<1x8x32xbf16>,
    return
  }
  func.func @transform_0(%arg0: i32) -> (i32, i32, i32) {
    %c0_i32 = arith.constant 0 : i32
    %c0_i32_0 = arith.constant 0 : i32
    %c0_i32_1 = arith.constant 0 : i32
    return %arg0, %c0_i32, %c0_i32_0 : i32, i32, i32
  }
  func.func @transform_1(%arg0: i32) -> (i32, i32, i32) {
    %c0_i32 = arith.constant 0 : i32
    %c0_i32_0 = arith.constant 0 : i32
    %c0_i32_1 = arith.constant 0 : i32
    %c0_i32_2 = arith.constant 0 : i32
    return %c0_i32, %c0_i32_0, %c0_i32_1 : i32, i32, i32
  }
  func.func @transform_2(%arg0: i32) -> (i32, i32, i32) {
    %c0_i32 = arith.constant 0 : i32
    %c0_i32_0 = arith.constant 0 : i32
    %c0_i32_1 = arith.constant 0 : i32
    %c0_i32_2 = arith.constant 0 : i32
    return %c0_i32, %c0_i32_0, %c0_i32_1 : i32, i32, i32
  }
  func.func @transform_3(%arg0: i32) -> (i32, i32, i32) {
    %c0_i32 = arith.constant 0 : i32
    %c0_i32_0 = arith.constant 0 : i32
    %c0_i32_1 = arith.constant 0 : i32
    %c0_i32_2 = arith.constant 0 : i32
    return %c0_i32, %c0_i32_0, %c0_i32_1 : i32, i32, i32
  }
  func.func @transform_4(%arg0: i32) -> (i32, i32, i32) {
    %c0_i32 = arith.constant 0 : i32
    %c0_i32_0 = arith.constant 0 : i32
    %c0_i32_1 = arith.constant 0 : i32
    %c0_i32_2 = arith.constant 0 : i32
    return %c0_i32, %c0_i32_0, %c0_i32_1 : i32, i32, i32
  }
  func.func @transform_5(%arg0: i32) -> (i32, i32, i32) {
    %c0_i32 = arith.constant 0 : i32
    %c0_i32_0 = arith.constant 0 : i32
    %c0_i32_1 = arith.constant 0 : i32
    %c0_i32_2 = arith.constant 0 : i32
    return %c0_i32, %c0_i32_0, %c0_i32_1 : i32, i32, i32
  }
  func.func @transform_6(%arg0: i32) -> (i32, i32, i32) {
    %c0_i32 = arith.constant 0 : i32
    %c0_i32_0 = arith.constant 0 : i32
    %c0_i32_1 = arith.constant 0 : i32
    %c0_i32_2 = arith.constant 0 : i32
    return %c0_i32, %c0_i32_0, %c0_i32_1 : i32, i32, i32
  }
  func.func @transform_7(%arg0: i32) -> (i32, i32, i32) {
    %c0_i32 = arith.constant 0 : i32
    %c0_i32_0 = arith.constant 0 : i32
    %c0_i32_1 = arith.constant 0 : i32
    %c0_i32_2 = arith.constant 0 : i32
    return %c0_i32, %c0_i32_0, %c0_i32_1 : i32, i32, i32
  }
  func.func @transform_8(%arg0: i32) -> (i32, i32) {
    %c0_i32 = arith.constant 0 : i32
    %c0_i32_0 = arith.constant 0 : i32
    %c0_i32_1 = arith.constant 0 : i32
    return %c0_i32, %c0_i32_0 : i32, i32
  }
  func.func @transform_9(%arg0: i32) -> (i32, i32, i32) {
    %c0_i32 = arith.constant 0 : i32
    %c0_i32_0 = arith.constant 0 : i32
    %c0_i32_1 = arith.constant 0 : i32
    %c0_i32_2 = arith.constant 0 : i32
    return %c0_i32, %c0_i32_0, %c0_i32_1 : i32, i32, i32
  }
  func.func @transform_10(%arg0: i32) -> (i32, i32, i32) {
    %c0_i32 = arith.constant 0 : i32
    %c0_i32_0 = arith.constant 0 : i32
    %c0_i32_1 = arith.constant 0 : i32
    return %arg0, %c0_i32, %c0_i32_0 : i32, i32, i32
  }
}

</mosaic_0001>

<llo_original>
// kernel: tpu_custom_call.1
$region0: #{tpu_custom_call.1}
  #allocation0 [shape = 'u32[]', space=smem, size = 0x4, offset = 0x4, fixed_abs, tag = 'smem constant byte address 0x4 - core index']
  #allocation1 [shape = 'u32[72,128]{1,0:T(1,128)}', space=vmem, size = 0x9000, scoped, tag = 'internal scratch']
  %s0 = inlined_call_operand.hbm [shape: f32[8,128], index: 0, kind: input, shape index: {}]
  %s1 = inlined_call_operand.hbm [shape: f32[8,128], index: 1, kind: output, shape index: {}]
  %s2 = sld [smem:[#allocation0]]
  $region18: #{tpu_custom_call.1} parent=0
    _
  %s4 = ssub.s32 1, %s2
  %s5 = scalar_select 0, %s4, %s2
  $region1: #{tpu_custom_call.1} parent=0
    #allocation2 [shape = 'u8[4096]{0}', space=vmem, size = 0x1000, scoped, tag = 'input window, operand 0, single buffered']
    #allocation3 [shape = 's32[1]{0}', space=sflag, size = 0x4, scoped, tag = 'scoped memory for tpu_custom_call.1']
    #allocation4 [shape = 's32[1]{0}', space=sflag, size = 0x4, scoped, tag = 'scoped memory for tpu_custom_call.1']
    #allocation5 [shape = 'u8[4096]{0}', space=vmem, size = 0x1000, scoped, tag = 'output window, operand 0, single buffered']
    %6 = vsyncpa [#allocation3], 0
    %7 = vsyncpa [#allocation4], 0
    // Predicated region
    $region2: #{tpu_custom_call.1} parent=1 // pred_check
      _
    $region3: #{tpu_custom_call.1} parent=1 // pred_check_branch
      %9 = sbr.rel (0) target = $region5
    $region4: #{tpu_custom_call.1} parent=1 // pred_region
      %11 = vsyncadd [#allocation3], 0
      %s13 = sshll.u32 %s0, 4
      %s14 = int_to_ptr.hbm [resolvable:$true] %s13
      %s15 = sshll.u32 [#allocation2], 4
      %s16 = int_to_ptr.vmem [resolvable:$true] %s15
      %18 = dma.hbm_to_vmem [thread:$0]  %s14, 128, %s16, [#allocation3]
    $region5: #{tpu_custom_call.1} parent=1 // pred_fallthru
      _
    // Predicated region
    $region6: #{tpu_custom_call.1} parent=1 // pred_check
      _
    $region7: #{tpu_custom_call.1} parent=1 // pred_check_branch
      %20 = sbr.rel (0) target = $region9
    $region8: #{tpu_custom_call.1} parent=1 // pred_region
      %22 = dma.done [#allocation3], 128
    $region9: #{tpu_custom_call.1} parent=1 // pred_fallthru
      _
    %v23 = vld [vmem:[#allocation2] sm:$0xff]
    %v24 = vadd.f32 %v23, 1.0
    %25 = vst [vmem:[#allocation5] sm:$0xff] %v24
    // Predicated region
    $region10: #{tpu_custom_call.1} parent=1 // pred_check
      _
    $region11: #{tpu_custom_call.1} parent=1 // pred_check_branch
      %27 = sbr.rel (0) target = $region13
    $region12: #{tpu_custom_call.1} parent=1 // pred_region
      %29 = vsyncadd [#allocation4], 0
      %s31 = sshll.u32 [#allocation5], 4
      %s32 = int_to_ptr.vmem [resolvable:$true] %s31
      %s33 = sshll.u32 %s1, 4
      %s34 = int_to_ptr.hbm [resolvable:$true] %s33
      %36 = dma.vmem_to_hbm [thread:$0]  %s32, 128, %s34, [#allocation4]
    $region13: #{tpu_custom_call.1} parent=1 // pred_fallthru
      _
    // Predicated region
    $region14: #{tpu_custom_call.1} parent=1 // pred_check
      _
    $region15: #{tpu_custom_call.1} parent=1 // pred_check_branch
      %38 = sbr.rel (0) target = $region17
    $region16: #{tpu_custom_call.1} parent=1 // pred_region
      %40 = dma.done [#allocation4], 128
    $region17: #{tpu_custom_call.1} parent=1 // pred_fallthru
      _
    %41 = vsyncpa [#allocation3], 1
    %42 = vsyncpa [#allocation4], 1

// kernel: tpu_custom_call.1
$region0: #{tpu_custom_call.1}
  #allocation0 [shape = 'u32[]', space=smem, size = 0x4, offset = 0x4, fixed_abs, tag = 'smem constant byte address 0x4 - core index']
  #allocation1 [shape = 'u32[72,128]{1,0:T(1,128)}', space=vmem, size = 0x9000, scoped, tag = 'internal scratch']
  #allocation2 [shape = 'f32[8,32]{1,0:T(8,128)}', space=vmem, size = 0x1000, scoped, tag = 'scratch operand']
  %s0 = inlined_call_operand.vmem [shape: bf16[2,8,32], index: 0, kind: input, shape index: {}]
  %s1 = inlined_call_operand.vmem [shape: bf16[4,32,128], index: 1, kind: input, shape index: {}]
  %s2 = inlined_call_operand.vmem [shape: f32[4,1,128], index: 2, kind: input, shape index: {}]
  %s3 = inlined_call_operand.vmem [shape: bf16[4,32,128], index: 3, kind: input, shape index: {}]
  %s4 = inlined_call_operand.vmem [shape: f32[4,1,128], index: 4, kind: input, shape index: {}]
  %s5 = inlined_call_operand.vmem [shape: bf16[4,32,128], index: 5, kind: input, shape index: {}]
  %s6 = inlined_call_operand.vmem [shape: f32[4,1,128], index: 6, kind: input, shape index: {}]
  %s7 = inlined_call_operand.vmem [shape: bf16[4,128,32], index: 7, kind: input, shape index: {}]
  %s8 = inlined_call_operand.vmem [shape: f32[1,32], index: 8, kind: input, shape index: {}]
  %s9 = inlined_call_operand.vmem [shape: bf16[4,8,8], index: 9, kind: input, shape index: {}]
  %s10 = inlined_call_operand.hbm [shape: bf16[2,8,32], index: 10, kind: output, shape index: {}]
  %s11 = sld [smem:[#allocation0]]
  $region80: #{tpu_custom_call.1} parent=0
    _
  %s13 = ssub.s32 1, %s11
  %s14 = scalar_select 0, %s13, %s11
  $region1: #{tpu_custom_call.1} parent=0
    #allocation3 [shape = 'u8[4096]{0}', space=vmem, size = 0x1000, scoped, tag = 'output window, operand 0']
    #allocation4 [shape = 's32[2]{0}', space=sflag, size = 0x8, scoped, tag = 'scoped memory for tpu_custom_call.1']
    %15 = vsyncpa [#allocation4], 0
    %s16 = scalar_lea.sflag [#allocation4], 1
    %17 = vsyncpa %s16, 0
    loop: start=0, step=1, limit=4
    $region2: #{tpu_custom_call.1} parent=1 // loop_pre_header
      _
    $region3: #{tpu_custom_call.1} parent=1 // loop_header
      %s19 = sphi 0, %s23
      %p20 = scmp.ge.s32.totalorder %s19, 4
      %s29 = sphi 0, %s31
      %s32 = sphi 0, %s29
      %s33 = sphi 0, %s32
      %s49 = sphi 0, %s33
      %s53 = sphi 0, %s53
      %s55 = sphi 0, %s53
      %s56 = sphi 0, %s55
      %s70 = sphi 0, %s56
      %s74 = sphi 0, %s74
      %s76 = sphi 0, %s74
      %s77 = sphi 0, %s76
      %s91 = sphi 0, %s77
      %s95 = sphi 0, %s95
      %s97 = sphi 0, %s95
      %s98 = sphi 0, %s97
      %s112 = sphi 0, %s98
      %s116 = sphi 0, %s116
      %s118 = sphi 0, %s116
      %s119 = sphi 0, %s118
      %s133 = sphi 0, %s119
      %s137 = sphi 0, %s137
      %s139 = sphi 0, %s137
      %s140 = sphi 0, %s139
      %s154 = sphi 0, %s140
      %s158 = sphi 0, %s158
      %s160 = sphi 0, %s158
      %s161 = sphi 0, %s160
      %s175 = sphi 0, %s161
      %s179 = sphi 0, %s179
      %s181 = sphi 0, %s179
      %s182 = sphi 0, %s181
      %s196 = sphi 0, %s182
      %s200 = sphi 0, %s200
      %s202 = sphi 0, %s200
      %s203 = sphi 0, %s202
      %s217 = sphi 0, %s203
      %s221 = sphi 0, %s221
      %s223 = sphi 0, %s221
      %s224 = sphi 0, %s223
      %s238 = sphi 0, %s224
      %s244 = sphi 0, %s246
      %s247 = sphi 0, %s244
      %s248 = sphi 0, %s247
      %s264 = sphi 0, %s248
    $region4: #{tpu_custom_call.1} parent=1 // loop_header_branch
      %22 = sbr.rel (%p20) target = $region8
    $region5: #{tpu_custom_call.1} parent=1 // loop_body
      %s24 = ssub.s32 %s19, 1
      %s25 = ssub.s32 %s19, 2
      %s26 = sadd.s32 %s19, 1
      %s27 = ssub.s32 %s19, %s26
      %p28 = scmp.eq.s32.totalorder %s27, 0
      %s30 = sadd.s32 %s29, 1
      %s31 = scalar_select %p28, %s29, %s30
      %p34 = pneg %p28
      %p35 = scmp.eq.s32.totalorder %s19, 1
      %p36 = por %p34, %p35
      %p37 = scmp.ne.s32.totalorder %s29, %s32
      %p38 = scmp.eq.s32.totalorder %s19, 0
      %p39 = por %p37, %p38
      %p40 = scmp.ne.s32.totalorder %s29, %s32
      %p41 = scmp.eq.s32.totalorder %s24, 1
      %p42 = por %p40, %p41
      %p43 = scmp.ne.s32.totalorder %s32, %s33
      %p44 = scmp.eq.s32.totalorder %s24, 0
      %p45 = por %p43, %p44
      %p46 = scmp.ne.s32.totalorder %s32, %s33
      %p47 = scmp.eq.s32.totalorder %s25, 1
      %p48 = por %p46, %p47
      %p50 = scmp.ne.s32.totalorder %s33, %s49
      %p51 = scmp.eq.s32.totalorder %s25, 0
      %p52 = por %p50, %p51
      %s54 = sadd.s32 %s53, 1
      %p57 = scmp.eq.s32.totalorder %s19, 1
      %p58 = scmp.ne.s32.totalorder %s53, %s55
      %p59 = scmp.eq.s32.totalorder %s19, 0
      %p60 = por %p58, %p59
      %p61 = scmp.ne.s32.totalorder %s53, %s55
      %p62 = scmp.eq.s32.totalorder %s24, 1
      %p63 = por %p61, %p62
      %p64 = scmp.ne.s32.totalorder %s55, %s56
      %p65 = scmp.eq.s32.totalorder %s24, 0
      %p66 = por %p64, %p65
      %p67 = scmp.ne.s32.totalorder %s55, %s56
      %p68 = scmp.eq.s32.totalorder %s25, 1
      %p69 = por %p67, %p68
      %p71 = scmp.ne.s32.totalorder %s56, %s70
      %p72 = scmp.eq.s32.totalorder %s25, 0
      %p73 = por %p71, %p72
      %s75 = sadd.s32 %s74, 1
      %p78 = scmp.eq.s32.totalorder %s19, 1
      %p79 = scmp.ne.s32.totalorder %s74, %s76
      %p80 = scmp.eq.s32.totalorder %s19, 0
      %p81 = por %p79, %p80
      %p82 = scmp.ne.s32.totalorder %s74, %s76
      %p83 = scmp.eq.s32.totalorder %s24, 1
      %p84 = por %p82, %p83
      %p85 = scmp.ne.s32.totalorder %s76, %s77
      %p86 = scmp.eq.s32.totalorder %s24, 0
      %p87 = por %p85, %p86
      %p88 = scmp.ne.s32.totalorder %s76, %s77
      %p89 = scmp.eq.s32.totalorder %s25, 1
      %p90 = por %p88, %p89
      %p92 = scmp.ne.s32.totalorder %s77, %s91
      %p93 = scmp.eq.s32.totalorder %s25, 0
      %p94 = por %p92, %p93
      %s96 = sadd.s32 %s95, 1
      %p99 = scmp.eq.s32.totalorder %s19, 1
      %p100 = scmp.ne.s32.totalorder %s95, %s97
      %p101 = scmp.eq.s32.totalorder %s19, 0
      %p102 = por %p100, %p101
      %p103 = scmp.ne.s32.totalorder %s95, %s97
      %p104 = scmp.eq.s32.totalorder %s24, 1
      %p105 = por %p103, %p104
      %p106 = scmp.ne.s32.totalorder %s97, %s98
      %p107 = scmp.eq.s32.totalorder %s24, 0
      %p108 = por %p106, %p107
      %p109 = scmp.ne.s32.totalorder %s97, %s98
      %p110 = scmp.eq.s32.totalorder %s25, 1
      %p111 = por %p109, %p110
      %p113 = scmp.ne.s32.totalorder %s98, %s112
      %p114 = scmp.eq.s32.totalorder %s25, 0
      %p115 = por %p113, %p114
      %s117 = sadd.s32 %s116, 1
      %p120 = scmp.eq.s32.totalorder %s19, 1
      %p121 = scmp.ne.s32.totalorder %s116, %s118
      %p122 = scmp.eq.s32.totalorder %s19, 0
      %p123 = por %p121, %p122
      %p124 = scmp.ne.s32.totalorder %s116, %s118
      %p125 = scmp.eq.s32.totalorder %s24, 1
      %p126 = por %p124, %p125
      %p127 = scmp.ne.s32.totalorder %s118, %s119
      %p128 = scmp.eq.s32.totalorder %s24, 0
      %p129 = por %p127, %p128
      %p130 = scmp.ne.s32.totalorder %s118, %s119
      %p131 = scmp.eq.s32.totalorder %s25, 1
      %p132 = por %p130, %p131
      %p134 = scmp.ne.s32.totalorder %s119, %s133
      %p135 = scmp.eq.s32.totalorder %s25, 0
      %p136 = por %p134, %p135
      %s138 = sadd.s32 %s137, 1
      %p141 = scmp.eq.s32.totalorder %s19, 1
      %p142 = scmp.ne.s32.totalorder %s137, %s139
      %p143 = scmp.eq.s32.totalorder %s19, 0
      %p144 = por %p142, %p143
      %p145 = scmp.ne.s32.totalorder %s137, %s139
      %p146 = scmp.eq.s32.totalorder %s24, 1
      %p147 = por %p145, %p146
      %p148 = scmp.ne.s32.totalorder %s139, %s140
      %p149 = scmp.eq.s32.totalorder %s24, 0
      %p150 = por %p148, %p149
      %p151 = scmp.ne.s32.totalorder %s139, %s140
      %p152 = scmp.eq.s32.totalorder %s25, 1
      %p153 = por %p151, %p152
      %p155 = scmp.ne.s32.totalorder %s140, %s154
      %p156 = scmp.eq.s32.totalorder %s25, 0
      %p157 = por %p155, %p156
      %s159 = sadd.s32 %s158, 1
      %p162 = scmp.eq.s32.totalorder %s19, 1
      %p163 = scmp.ne.s32.totalorder %s158, %s160
      %p164 = scmp.eq.s32.totalorder %s19, 0
      %p165 = por %p163, %p164
      %p166 = scmp.ne.s32.totalorder %s158, %s160
      %p167 = scmp.eq.s32.totalorder %s24, 1
      %p168 = por %p166, %p167
      %p169 = scmp.ne.s32.totalorder %s160, %s161
      %p170 = scmp.eq.s32.totalorder %s24, 0
      %p171 = por %p169, %p170
      %p172 = scmp.ne.s32.totalorder %s160, %s161
      %p173 = scmp.eq.s32.totalorder %s25, 1
      %p174 = por %p172, %p173
      %p176 = scmp.ne.s32.totalorder %s161, %s175
      %p177 = scmp.eq.s32.totalorder %s25, 0
      %p178 = por %p176, %p177
      %s180 = sadd.s32 %s179, 1
      %p183 = scmp.eq.s32.totalorder %s19, 1
      %p184 = scmp.ne.s32.totalorder %s179, %s181
      %p185 = scmp.eq.s32.totalorder %s19, 0
      %p186 = por %p184, %p185
      %p187 = scmp.ne.s32.totalorder %s179, %s181
      %p188 = scmp.eq.s32.totalorder %s24, 1
      %p189 = por %p187, %p188
      %p190 = scmp.ne.s32.totalorder %s181, %s182
      %p191 = scmp.eq.s32.totalorder %s24, 0
      %p192 = por %p190, %p191
      %p193 = scmp.ne.s32.totalorder %s181, %s182
      %p194 = scmp.eq.s32.totalorder %s25, 1
      %p195 = por %p193, %p194
      %p197 = scmp.ne.s32.totalorder %s182, %s196
      %p198 = scmp.eq.s32.totalorder %s25, 0
      %p199 = por %p197, %p198
      %s201 = sadd.s32 %s200, 1
      %p204 = scmp.eq.s32.totalorder %s19, 1
      %p205 = scmp.ne.s32.totalorder %s200, %s202
      %p206 = scmp.eq.s32.totalorder %s19, 0
      %p207 = por %p205, %p206
      %p208 = scmp.ne.s32.totalorder %s200, %s202
      %p209 = scmp.eq.s32.totalorder %s24, 1
      %p210 = por %p208, %p209
      %p211 = scmp.ne.s32.totalorder %s202, %s203
      %p212 = scmp.eq.s32.totalorder %s24, 0
      %p213 = por %p211, %p212
      %p214 = scmp.ne.s32.totalorder %s202, %s203
      %p215 = scmp.eq.s32.totalorder %s25, 1
      %p216 = por %p214, %p215
      %p218 = scmp.ne.s32.totalorder %s203, %s217
      %p219 = scmp.eq.s32.totalorder %s25, 0
      %p220 = por %p218, %p219
      %s222 = sadd.s32 %s221, 1
      %p225 = scmp.eq.s32.totalorder %s19, 1
      %p226 = scmp.ne.s32.totalorder %s221, %s223
      %p227 = scmp.eq.s32.totalorder %s19, 0
      %p228 = por %p226, %p227
      %p229 = scmp.ne.s32.totalorder %s221, %s223
      %p230 = scmp.eq.s32.totalorder %s24, 1
      %p231 = por %p229, %p230
      %p232 = scmp.ne.s32.totalorder %s223, %s224
      %p233 = scmp.eq.s32.totalorder %s24, 0
      %p234 = por %p232, %p233
      %p235 = scmp.ne.s32.totalorder %s223, %s224
      %p236 = scmp.eq.s32.totalorder %s25, 1
      %p237 = por %p235, %p236
      %p239 = scmp.ne.s32.totalorder %s224, %s238
      %p240 = scmp.eq.s32.totalorder %s25, 0
      %p241 = por %p239, %p240
      %s242 = ssub.s32 %s19, %s26
      %p243 = scmp.eq.s32.totalorder %s242, 0
      %s245 = sadd.s32 %s244, 1
      %s246 = scalar_select %p243, %s244, %s245
      %p249 = pneg %p243
      %p250 = scmp.eq.s32.totalorder %s19, 1
      %p251 = por %p249, %p250
      %p252 = scmp.ne.s32.totalorder %s244, %s247
      %p253 = scmp.eq.s32.totalorder %s19, 0
      %p254 = por %p252, %p253
      %p255 = scmp.ne.s32.totalorder %s244, %s247
      %p256 = scmp.eq.s32.totalorder %s24, 1
      %p257 = por %p255, %p256
      %p258 = scmp.ne.s32.totalorder %s247, %s248
      %p259 = scmp.eq.s32.totalorder %s24, 0
      %p260 = por %p258, %p259
      %p261 = scmp.ne.s32.totalorder %s247, %s248
      %p262 = scmp.eq.s32.totalorder %s25, 1
      %p263 = por %p261, %p262
      %p265 = scmp.ne.s32.totalorder %s248, %s264
      %p266 = scmp.eq.s32.totalorder %s25, 0
      %p267 = por %p265, %p266
      %p268 = scmp.le.s32.totalorder 1, %s19
      %p269 = scmp.lt.s32.totalorder %s19, 3
      %p270 = pnand %p268, %p269
      %p271 = pneg %p270
      // Predicated region
      $region9: #{tpu_custom_call.1} parent=5 // pred_check
        _
      $region10: #{tpu_custom_call.1} parent=5 // pred_check_branch
        %273 = sbr.rel (%p270) target = $region12
      $region11: #{tpu_custom_call.1} parent=5 // pred_region
        %s274 = ssub.s32 %s19, 1
        // Predicated region
        $region13: #{tpu_custom_call.1} parent=11 // pred_check
          %p275 = pneg %p66
        $region14: #{tpu_custom_call.1} parent=11 // pred_check_branch
          %277 = sbr.rel (%p275) target = $region16
        $region15: #{tpu_custom_call.1} parent=11 // pred_region
          _
        $region16: #{tpu_custom_call.1} parent=11 // pred_fallthru
          _
        // Predicated region
        $region17: #{tpu_custom_call.1} parent=11 // pred_check
          %p278 = pneg %p87
        $region18: #{tpu_custom_call.1} parent=11 // pred_check_branch
          %280 = sbr.rel (%p278) target = $region20
        $region19: #{tpu_custom_call.1} parent=11 // pred_region
          _
        $region20: #{tpu_custom_call.1} parent=11 // pred_fallthru
          _
        // Predicated region
        $region21: #{tpu_custom_call.1} parent=11 // pred_check
          %p281 = pneg %p108
        $region22: #{tpu_custom_call.1} parent=11 // pred_check_branch
          %283 = sbr.rel (%p281) target = $region24
        $region23: #{tpu_custom_call.1} parent=11 // pred_region
          _
        $region24: #{tpu_custom_call.1} parent=11 // pred_fallthru
          _
        // Predicated region
        $region25: #{tpu_custom_call.1} parent=11 // pred_check
          %p284 = pneg %p129
        $region26: #{tpu_custom_call.1} parent=11 // pred_check_branch
          %286 = sbr.rel (%p284) target = $region28
        $region27: #{tpu_custom_call.1} parent=11 // pred_region
          _
        $region28: #{tpu_custom_call.1} parent=11 // pred_fallthru
          _
        // Predicated region
        $region29: #{tpu_custom_call.1} parent=11 // pred_check
          %p287 = pneg %p150
        $region30: #{tpu_custom_call.1} parent=11 // pred_check_branch
          %289 = sbr.rel (%p287) target = $region32
        $region31: #{tpu_custom_call.1} parent=11 // pred_region
          _
        $region32: #{tpu_custom_call.1} parent=11 // pred_fallthru
          _
        // Predicated region
        $region33: #{tpu_custom_call.1} parent=11 // pred_check
          %p290 = pneg %p171
        $region34: #{tpu_custom_call.1} parent=11 // pred_check_branch
          %292 = sbr.rel (%p290) target = $region36
        $region35: #{tpu_custom_call.1} parent=11 // pred_region
          _
        $region36: #{tpu_custom_call.1} parent=11 // pred_fallthru
          _
        // Predicated region
        $region37: #{tpu_custom_call.1} parent=11 // pred_check
          %p293 = pneg %p192
        $region38: #{tpu_custom_call.1} parent=11 // pred_check_branch
          %295 = sbr.rel (%p293) target = $region40
        $region39: #{tpu_custom_call.1} parent=11 // pred_region
          _
        $region40: #{tpu_custom_call.1} parent=11 // pred_fallthru
          _
        // Predicated region
        $region41: #{tpu_custom_call.1} parent=11 // pred_check
          %p296 = pneg %p213
        $region42: #{tpu_custom_call.1} parent=11 // pred_check_branch
          %298 = sbr.rel (%p296) target = $region44
        $region43: #{tpu_custom_call.1} parent=11 // pred_region
          _
        $region44: #{tpu_custom_call.1} parent=11 // pred_fallthru
          _
        // Predicated region
        $region45: #{tpu_custom_call.1} parent=11 // pred_check
          %p299 = pneg %p234
        $region46: #{tpu_custom_call.1} parent=11 // pred_check_branch
          %301 = sbr.rel (%p299) target = $region48
        $region47: #{tpu_custom_call.1} parent=11 // pred_region
          _
        $region48: #{tpu_custom_call.1} parent=11 // pred_fallthru
          _
      $region12: #{tpu_custom_call.1} parent=5 // pred_fallthru
        _
      %p302 = scmp.lt.s32.totalorder %s19, 2
      // Predicated region
      $region49: #{tpu_custom_call.1} parent=5 // pred_check
        %p303 = pneg %p302
      $region50: #{tpu_custom_call.1} parent=5 // pred_check_branch
        %305 = sbr.rel (%p303) target = $region52
      $region51: #{tpu_custom_call.1} parent=5 // pred_region
        // Predicated region
        $region53: #{tpu_custom_call.1} parent=51 // pred_check
          %p306 = pneg %p39
        $region54: #{tpu_custom_call.1} parent=51 // pred_check_branch
          %308 = sbr.rel (%p306) target = $region56
        $region55: #{tpu_custom_call.1} parent=51 // pred_region
          %p309 = scmp.lt.s32.totalorder %s19, 1
          %s310 = scalar_select %p309, %s19, 1
          %s311 = smul.addr %s310, 4
          %s312 = scalar_lea.vmem %s0, %s311
        $region56: #{tpu_custom_call.1} parent=51 // pred_fallthru
          _
      $region52: #{tpu_custom_call.1} parent=5 // pred_fallthru
        _
      %p313 = scmp.le.s32.totalorder 1, %s19
      %p314 = scmp.lt.s32.totalorder %s19, 3
      %p315 = pnand %p313, %p314
      %p316 = pneg %p315
      // Predicated region
      $region57: #{tpu_custom_call.1} parent=5 // pred_check
        _
      $region58: #{tpu_custom_call.1} parent=5 // pred_check_branch
        %318 = sbr.rel (%p315) target = $region60
      $region59: #{tpu_custom_call.1} parent=5 // pred_region
        %s319 = ssub.s32 %s19, 1
        %p320 = scmp.lt.s32.totalorder %s24, 1
        %s321 = scalar_select %p320, %s24, 1
        %s322 = smul.addr %s321, 4
        %s323 = scalar_lea.vmem %s0, %s322
        %p324 = pneg %p45
        %p325 = pneg %p42
        %p326 = pneg %p66
        %p327 = pneg %p63
        %p328 = pneg %p87
        %p329 = pneg %p84
        %p330 = pneg %p108
        %p331 = pneg %p105
        %p332 = pneg %p129
        %p333 = pneg %p126
        %p334 = pneg %p150
        %p335 = pneg %p147
        %p336 = pneg %p171
        %p337 = pneg %p168
        %p338 = pneg %p192
        %p339 = pneg %p189
        %p340 = pneg %p213
        %p341 = pneg %p210
        %p342 = pneg %p234
        %p343 = pneg %p231
        %p344 = pneg %p260
        %p345 = pneg %p257
        %s346 = sand.u32 %s247, 1
        %s347 = scalar_lea.sflag [#allocation4], %s346
        %s348 = sand.u32 %s247, 1
        %s349 = smul.addr %s348, 4
        %s350 = scalar_lea.vmem [#allocation3], %s349
        %p351 = scmp.lt.s32.totalorder %s24, 1
        %s352 = scalar_select %p351, %s24, 1
        %s353 = smul.addr %s352, 4
        %s354 = scalar_lea.vmem %s0, %s353
        %v356 = vld [vmem:[%s354] sm:$0xf]
        %vm357 = vcmask 261120
        %358 = vst.msk [vmem:[#allocation2] sm:$0xff] %vm357, 0.0
        loop: start=0, step=1, limit=4
        $region61: #{tpu_custom_call.1} parent=59 // loop_pre_header
          _
        $region62: #{tpu_custom_call.1} parent=59 // loop_header
          %s360 = sphi 0, %s364
          %p361 = scmp.ge.s32.totalorder %s360, 4
        $region63: #{tpu_custom_call.1} parent=59 // loop_header_branch
          %363 = sbr.rel (%p361) target = $region67
        $region64: #{tpu_custom_call.1} parent=59 // loop_body
          %s365 = smul.u32 %s360, 4
          %s366 = smul.addr %s365, 4
          %s367 = scalar_lea.vmem %s1, %s366
          %v368 = vld [vmem:[%s367] sm:$0xf]
          %v369 = vld [vmem:[%s367 + $0x4] sm:$0xf]
          %v370 = vld [vmem:[%s367 + $0x8] sm:$0xf]
          %v371 = vld [vmem:[%s367 + $0xc] sm:$0xf]
          %s372 = scalar_lea.vmem %s2, %s360
          %v373 = vld [vmem:[%s372] sm:$0x1]
          %v375 = vperm.slane %v373, 0
          %v381 = vunpack.c.l.b16 %v368
          %v382 = vunpack.c.l.b16 %v369
          %v383 = vunpack.c.l.b16 %v370
          %v384 = vunpack.c.l.b16 %v371
          %v385 = vpack.c.b16 %v382, %v381
          %v386 = vpack.c.b16 %v384, %v383
          %v390 = vsel %vm357, %v356, 0
          %392 = vmatpush.bf16.msra.mxu0 0
          %393 = vmatpush.bf16.msra.mxu0 0
          %394 = vmatpush.bf16.msra.mxu0 0
          %395 = vmatpush.bf16.msra.mxu0 0
          %396 = vmatpush.bf16.msra.mxu0 0
          %397 = vmatpush.bf16.msra.mxu0 0
          %398 = vmatpush.bf16.msra.mxu0 %v386
          %399 = vmatpush.bf16.msra.mxu0 %v385
          %400 = vmatmul.bf16.gmra.mxu0 %v390
          %v401 = vpop.f32.mrf.mxu0
          %v402 = vadd.f32 %v375, %v401
          %v403 = vpop.f32.mrf.mxu0
          %404 = vdwg.mxu0
          %v405 = vpack.c.bf16 %v402, %v402
          %s406 = smul.addr %s365, 4
          %s407 = scalar_lea.vmem %s3, %s406
          %v408 = vld [vmem:[%s407] sm:$0xf]
          %v409 = vld [vmem:[%s407 + $0x4] sm:$0xf]
          %v410 = vld [vmem:[%s407 + $0x8] sm:$0xf]
          %v411 = vld [vmem:[%s407 + $0xc] sm:$0xf]
          %s412 = scalar_lea.vmem %s4, %s360
          %v413 = vld [vmem:[%s412] sm:$0x1]
          %v415 = vperm.slane %v413, 0
          %v421 = vunpack.c.l.b16 %v408
          %v422 = vunpack.c.l.b16 %v409
          %v423 = vunpack.c.l.b16 %v410
          %v424 = vunpack.c.l.b16 %v411
          %v425 = vpack.c.b16 %v422, %v421
          %v426 = vpack.c.b16 %v424, %v423
          %429 = vmatpush.bf16.msra.mxu0 0
          %430 = vmatpush.bf16.msra.mxu0 0
          %431 = vmatpush.bf16.msra.mxu0 0
          %432 = vmatpush.bf16.msra.mxu0 0
          %433 = vmatpush.bf16.msra.mxu0 0
          %434 = vmatpush.bf16.msra.mxu0 0
          %435 = vmatpush.bf16.msra.mxu0 %v426
          %436 = vmatpush.bf16.msra.mxu0 %v425
          %437 = vmatmul.bf16.gmra.mxu0 %v390
          %v438 = vpop.f32.mrf.mxu0
          %v439 = vadd.f32 %v415, %v438
          %v440 = vpop.f32.mrf.mxu0
          %441 = vdwg.mxu0
          %v442 = vpack.c.bf16 %v439, %v439
          %s443 = smul.addr %s365, 4
          %s444 = scalar_lea.vmem %s5, %s443
          %v445 = vld [vmem:[%s444] sm:$0xf]
          %v446 = vld [vmem:[%s444 + $0x4] sm:$0xf]
          %v447 = vld [vmem:[%s444 + $0x8] sm:$0xf]
          %v448 = vld [vmem:[%s444 + $0xc] sm:$0xf]
          %s449 = scalar_lea.vmem %s6, %s360
          %v450 = vld [vmem:[%s449] sm:$0x1]
          %v452 = vperm.slane %v450, 0
          %v458 = vunpack.c.l.b16 %v445
          %v459 = vunpack.c.l.b16 %v446
          %v460 = vunpack.c.l.b16 %v447
          %v461 = vunpack.c.l.b16 %v448
          %v462 = vpack.c.b16 %v459, %v458
          %v463 = vpack.c.b16 %v461, %v460
          %466 = vmatpush.bf16.msra.mxu0 0
          %467 = vmatpush.bf16.msra.mxu0 0
          %468 = vmatpush.bf16.msra.mxu0 0
          %469 = vmatpush.bf16.msra.mxu0 0
          %470 = vmatpush.bf16.msra.mxu0 0
          %471 = vmatpush.bf16.msra.mxu0 0
          %472 = vmatpush.bf16.msra.mxu0 %v463
          %473 = vmatpush.bf16.msra.mxu0 %v462
          %474 = vmatmul.bf16.gmra.mxu0 %v390
          %v475 = vpop.f32.mrf.mxu0
          %v476 = vadd.f32 %v452, %v475
          %v477 = vpop.f32.mrf.mxu0
          %478 = vdwg.mxu0
          %v479 = vpack.c.bf16 %v476, %v476
          %s480 = smul.addr %s360, 4
          %s481 = scalar_lea.vmem %s9, %s480
          %v482 = vld [vmem:[%s481] sm:$0xf]
          %v483 = vunpack.c.l.bf16 %v482
          %484 = vmatpush.bf16.xpose.msra.mxu0 0
          %485 = vmatpush.bf16.xpose.msra.mxu0 0
          %486 = vmatpush.bf16.xpose.msra.mxu0 0
          %487 = vmatpush.bf16.xpose.msra.mxu0 0
          %488 = vmatpush.bf16.xpose.msra.mxu0 0
          %489 = vmatpush.bf16.xpose.msra.mxu0 0
          %490 = vmatpush.bf16.xpose.msra.mxu0 0
          %491 = vmatpush.bf16.xpose.msra.mxu0 %v442
          %492 = vmatmul.bf16.gmra.mxu0 %v405
          %v493 = vpop.f32.mrf.mxu0
          %v494 = vadd.f32 %v483, %v493
          %v495 = vpop.f32.mrf.mxu0
          %496 = vdwg.mxu0
          %vm497 = vcmask 64512
          %v498 = vsel %vm497, %v494, -inf
          %499 = vmax.xlane.f32.xlu0 %v498
          %v500 = vpop.xlane.xlu0 %499
          %v501 = vsub.f32 %v494, %v500
          %v502 = vmul.f32 %v501, 1.442695
          %v503 = vpow.pop %v502
          %v504 = vsel %vm497, %v503, 0.0
          %505 = vadd.xlane.f32.xlu0 %v504
          %v506 = vpop.xlane.xlu0 %505
          %v507 = vpack.c.bf16 %v503, %v503
          %v509 = vsel %vm497, %v507, 0
          %vm511 = vcmask 1043456
          %v513 = vsel %vm511, %v479, 0
          %515 = vmatpush.bf16.msra.mxu0 0
          %516 = vmatpush.bf16.msra.mxu0 0
          %517 = vmatpush.bf16.msra.mxu0 0
          %518 = vmatpush.bf16.msra.mxu0 0
          %519 = vmatpush.bf16.msra.mxu0 0
          %520 = vmatpush.bf16.msra.mxu0 0
          %521 = vmatpush.bf16.msra.mxu0 0
          %522 = vmatpush.bf16.msra.mxu0 %v513
          %523 = vmatmul.bf16.gmra.mxu0 %v509
          %v524 = vpop.f32.mrf.mxu0
          %v525 = vadd.f32 0.0, %v524
          %v526 = vpop.f32.mrf.mxu0
          %527 = vdwg.mxu0
          %v528 = vrcp.pop %v506
          %v529 = vmul.f32 %v525, %v528
          %v530 = vpack.c.bf16 %v529, %v529
          %v531 = vld [vmem:[#allocation2] sm:$0xff]
          %s532 = smul.u32 %s360, 16
          %s533 = smul.addr %s532, 4
          %s534 = scalar_lea.vmem %s7, %s533
          %v535 = vld [vmem:[%s534] sm:$0xf]
          %v536 = vld [vmem:[%s534 + $0x4] sm:$0xf]
          %v537 = vld [vmem:[%s534 + $0x8] sm:$0xf]
          %v538 = vld [vmem:[%s534 + $0xc] sm:$0xf]
          %v539 = vld [vmem:[%s534 + $0x10] sm:$0xf]
          %v540 = vld [vmem:[%s534 + $0x14] sm:$0xf]
          %v541 = vld [vmem:[%s534 + $0x18] sm:$0xf]
          %v542 = vld [vmem:[%s534 + $0x1c] sm:$0xf]
          %v543 = vld [vmem:[%s534 + $0x20] sm:$0xf]
          %v544 = vld [vmem:[%s534 + $0x24] sm:$0xf]
          %v545 = vld [vmem:[%s534 + $0x28] sm:$0xf]
          %v546 = vld [vmem:[%s534 + $0x2c] sm:$0xf]
          %v547 = vld [vmem:[%s534 + $0x30] sm:$0xf]
          %v548 = vld [vmem:[%s534 + $0x34] sm:$0xf]
          %v549 = vld [vmem:[%s534 + $0x38] sm:$0xf]
          %v550 = vld [vmem:[%s534 + $0x3c] sm:$0xf]
          %v567 = vunpack.c.l.b16 %v535
          %v568 = vunpack.c.l.b16 %v536
          %v569 = vunpack.c.l.b16 %v537
          %v570 = vunpack.c.l.b16 %v538
          %v571 = vunpack.c.l.b16 %v539
          %v572 = vunpack.c.l.b16 %v540
          %v573 = vunpack.c.l.b16 %v541
          %v574 = vunpack.c.l.b16 %v542
          %v575 = vunpack.c.l.b16 %v543
          %v576 = vunpack.c.l.b16 %v544
          %v577 = vunpack.c.l.b16 %v545
          %v578 = vunpack.c.l.b16 %v546
          %v579 = vunpack.c.l.b16 %v547
          %v580 = vunpack.c.l.b16 %v548
          %v581 = vunpack.c.l.b16 %v549
          %v582 = vunpack.c.l.b16 %v550
          %v583 = vpack.c.b16 %v568, %v567
          %v584 = vpack.c.b16 %v570, %v569
          %v585 = vpack.c.b16 %v572, %v571
          %v586 = vpack.c.b16 %v574, %v573
          %v587 = vpack.c.b16 %v576, %v575
          %v588 = vpack.c.b16 %v578, %v577
          %v589 = vpack.c.b16 %v580, %v579
          %v590 = vpack.c.b16 %v582, %v581
          %599 = vmatpush.bf16.msra.mxu0 %v590
          %600 = vmatpush.bf16.msra.mxu0 %v589
          %601 = vmatpush.bf16.msra.mxu0 %v588
          %602 = vmatpush.bf16.msra.mxu0 %v587
          %603 = vmatpush.bf16.msra.mxu0 %v586
          %604 = vmatpush.bf16.msra.mxu0 %v585
          %605 = vmatpush.bf16.msra.mxu0 %v584
          %606 = vmatpush.bf16.msra.mxu0 %v583
          %607 = vmatmul.bf16.gmra.mxu0 %v530
          %v608 = vpop.f32.mrf.mxu0
          %v609 = vadd.f32 0.0, %v608
          %v610 = vpop.f32.mrf.mxu0
          %611 = vdwg.mxu0
          %v612 = vadd.f32 %v531, %v609
          %613 = vst.msk [vmem:[#allocation2] sm:$0xff] %vm357, %v612
        $region65: #{tpu_custom_call.1} parent=59 // loop_footer
          %s364 = sadd.s32 1, %s360
        $region66: #{tpu_custom_call.1} parent=59 // loop_footer_branch
          %359 = sbr.rel target = $region62
        $region67: #{tpu_custom_call.1} parent=59 // loop_exit
          _
        %v614 = vld [vmem:[#allocation2] sm:$0xff]
        %v615 = vld [vmem:[%s8] sm:$0x1]
        %v617 = vperm.slane %v615, 0
        %v619 = vadd.f32 %v614, %v617
        %v620 = vpack.c.bf16 %v619, %v619
        %vm621 = vcmask 257024
        %622 = vst.msk [vmem:[%s350] sm:$0xf] %vm621, %v620
        %s623 = sand.u32 %s247, 1
        %s624 = scalar_lea.sflag [#allocation4], %s623
        %s625 = sand.u32 %s247, 1
        %s626 = smul.addr %s625, 4
        %s627 = scalar_lea.vmem [#allocation3], %s626
        // Predicated region
        $region68: #{tpu_custom_call.1} parent=59 // pred_check
          %p628 = pneg %p257
        $region69: #{tpu_custom_call.1} parent=59 // pred_check_branch
          %630 = sbr.rel (%p628) target = $region71
        $region70: #{tpu_custom_call.1} parent=59 // pred_region
          %632 = vsyncadd %s624, 0
          %s633 = smul.addr %s24, 4
          %s634 = scalar_lea.hbm %s10, %s633
          %s636 = sshll.u32 %s627, 4
          %s637 = int_to_ptr.vmem [resolvable:$true] %s636
          %s638 = sshll.u32 %s634, 4
          %s639 = int_to_ptr.hbm [resolvable:$true] %s638
          %641 = dma.vmem_to_hbm [thread:$0]  %s637, 64, %s639, %s624
        $region71: #{tpu_custom_call.1} parent=59 // pred_fallthru
          _
      $region60: #{tpu_custom_call.1} parent=5 // pred_fallthru
        _
      %p642 = scmp.le.s32.totalorder 2, %s19
      // Predicated region
      $region72: #{tpu_custom_call.1} parent=5 // pred_check
        %p643 = pneg %p642
      $region73: #{tpu_custom_call.1} parent=5 // pred_check_branch
        %645 = sbr.rel (%p643) target = $region75
      $region74: #{tpu_custom_call.1} parent=5 // pred_region
        %s646 = ssub.s32 %s19, 2
        // Predicated region
        $region76: #{tpu_custom_call.1} parent=74 // pred_check
          %p647 = pneg %p263
        $region77: #{tpu_custom_call.1} parent=74 // pred_check_branch
          %649 = sbr.rel (%p647) target = $region79
        $region78: #{tpu_custom_call.1} parent=74 // pred_region
          %s650 = sand.u32 %s248, 1
          %s651 = scalar_lea.sflag [#allocation4], %s650
          %s652 = sand.u32 %s248, 1
          %s653 = smul.addr %s652, 4
          %s654 = scalar_lea.vmem [#allocation3], %s653
          %656 = dma.done %s651, 64
        $region79: #{tpu_custom_call.1} parent=74 // pred_fallthru
          _
      $region75: #{tpu_custom_call.1} parent=5 // pred_fallthru
        _
    $region6: #{tpu_custom_call.1} parent=1 // loop_footer
      %s23 = sadd.s32 1, %s19
    $region7: #{tpu_custom_call.1} parent=1 // loop_footer_branch
      %18 = sbr.rel target = $region3
    $region8: #{tpu_custom_call.1} parent=1 // loop_exit
      _
    %657 = vsyncpa [#allocation4], 1
    %s658 = scalar_lea.sflag [#allocation4], 1
    %659 = vsyncpa %s658, 1

</llo_original>
